<compile_context>
chip_gen: v7x
topology: tpu7x:2x2x1
jax: 0.10.0
libtpu: 0.0.40
codegen_flags: <defaults>
</compile_context>

<pallas_src>
import math

import jax
import jax.numpy as jnp
from jax.experimental import pallas as pl
from jax.experimental.pallas import tpu as pltpu


def critic_kernel(x_ref,
                  w1_ref, b1_ref, g_ref, beta_ref,
                  w2_ref, b2_ref,
                  w3_ref, b3_ref,
                  w4_ref, b4_ref,
                  o_ref):
    # Activations enter in f32; cast to bf16 only for the MXU matmuls.
    x = x_ref[...].astype(jnp.bfloat16)

    # Linear 1 (bf16 MXU, f32 accumulate) + bias + ReLU (f32 VPU)
    h = jnp.dot(x, w1_ref[...], preferred_element_type=jnp.float32) + b1_ref[...]
    h = jnp.maximum(h, 0.0)

    # LayerNorm over features, one-pass stats, f32 math (torch default eps=1e-5)
    mu = jnp.mean(h, axis=-1, keepdims=True)
    var = jnp.maximum(jnp.mean(h * h, axis=-1, keepdims=True) - mu * mu, 0.0)
    h = (h - mu) * jax.lax.rsqrt(var + 1e-5) * g_ref[...] + beta_ref[...]

    # Dropout(0.1): identity in eval/inference mode.
    # TODO(synk): training-mode dropout (random mask + 1/(1-p) scale) not emitted.

    # Linear 2 + ReLU
    h = jnp.dot(h.astype(jnp.bfloat16), w2_ref[...],
                preferred_element_type=jnp.float32) + b2_ref[...]
    h = jnp.maximum(h, 0.0)

    # Dropout(0.1): identity in eval/inference mode.

    # Linear 3 + ReLU  (hidden -> hidden // 2)
    h = jnp.dot(h.astype(jnp.bfloat16), w3_ref[...],
                preferred_element_type=jnp.float32) + b3_ref[...]
    h = jnp.maximum(h, 0.0)

    # Linear 4 (hidden // 2 -> 1), emitted lane-dense:
    # w4 is stored (1, H2) (torch (out, in) layout); contracting both last dims
    # gives a (1, batch_tile) row with batch on the lane axis -> unmasked vst.
    out_t = jax.lax.dot_general(
        w4_ref[...], h.astype(jnp.bfloat16),
        dimension_numbers=(((1,), (1,)), ((), ())),
        preferred_element_type=jnp.float32) + b4_ref[...]
    o_ref[...] = out_t.astype(o_ref.dtype)


def magec_critic_forward(x, params, *, batch_tile=128, training=False):
    # Inference-only kernel (Dropout == identity).
    assert not training, "training-mode dropout is not implemented in this kernel"

    # torch: 1-D input gets unsqueezed to (1, D)
    if x.ndim == 1:
        x = x[None, :]
    B, D = x.shape
    H = params["w1"].shape[1]
    H2 = params["w3"].shape[1]

    # batch_tile should be a multiple of 8 (or == B); rows in a padded last
    # tile are computed but never read back.
    bt = min(batch_tile, B)
    grid = (pl.cdiv(B, bt),)

    # Grid-invariant parameter blocks: single-buffered (no 2x VMEM copies).
    def const_spec(shape):
        return pl.BlockSpec(shape, lambda i: (0, 0), pipeline_mode=pl.Buffered(1))

    out = pl.pallas_call(
        critic_kernel,
        # Lane-dense output slab: (1, B) with batch on lanes.
        out_shape=jax.ShapeDtypeStruct((1, B), x.dtype),
        grid_spec=pltpu.PrefetchScalarGridSpec(
            num_scalar_prefetch=0,
            grid=grid,
            in_specs=[
                pl.BlockSpec((bt, D), lambda i: (i, 0)),  # x tile (batch on sublanes)
                const_spec((D, H)),    # w1 (bf16)
                const_spec((1, H)),    # b1
                const_spec((1, H)),    # ln gamma
                const_spec((1, H)),    # ln beta
                const_spec((H, H)),    # w2 (bf16)
                const_spec((1, H)),    # b2
                const_spec((H, H2)),   # w3 (bf16)
                const_spec((1, H2)),   # b3
                const_spec((1, H2)),   # w4 (bf16, stored (out, in))
                const_spec((1, 1)),    # b4
            ],
            out_specs=pl.BlockSpec((1, bt), lambda i: (0, i)),
        ),
        compiler_params=pltpu.CompilerParams(
            dimension_semantics=("parallel",)),  # shards batch tiles across TCs
    )(x,
      params["w1"], params["b1"], params["gamma"], params["beta"],
      params["w2"], params["b2"],
      params["w3"], params["b3"],
      params["w4"], params["b4"])

    # Layout plumbing only: (1, B) lane-dense slab -> (B, 1) like the torch module.
    return out.reshape(B, 1)


def init_params(key, global_state_size, hidden_size):
    """Xavier-uniform weights (stored bf16 for the MXU), zero biases.

    Matches MAGECCritic._init_weights; LayerNorm gamma=1, beta=0.
    w1/w2/w3 are stored (in, out) so the hot path is `x @ W`; w4 is stored
    (out, in) = (1, H2) so the final dot directly yields a lane-dense row.
    """
    def xavier(k, fan_in, fan_out, shape):
        bound = math.sqrt(6.0 / (fan_in + fan_out))
        w = jax.random.uniform(k, shape, jnp.float32, -bound, bound)
        return w.astype(jnp.bfloat16)

    k1, k2, k3, k4 = jax.random.split(key, 4)
    H, H2 = hidden_size, hidden_size // 2
    return {
        "w1": xavier(k1, global_state_size, H, (global_state_size, H)),
        "b1": jnp.zeros((1, H), jnp.float32),
        "gamma": jnp.ones((1, H), jnp.float32),
        "beta": jnp.zeros((1, H), jnp.float32),
        "w2": xavier(k2, H, H, (H, H)),
        "b2": jnp.zeros((1, H), jnp.float32),
        "w3": xavier(k3, H, H2, (H, H2)),
        "b3": jnp.zeros((1, H2), jnp.float32),
        "w4": xavier(k4, H2, 1, (1, H2)),   # (out, in) layout
        "b4": jnp.zeros((1, 1), jnp.float32),
    }


def reference_forward(x, p):
    """Pure-JAX reference mirroring the kernel math (bf16 matmuls, f32 rest)."""
    if x.ndim == 1:
        x = x[None, :]
    bf16, f32 = jnp.bfloat16, jnp.float32
    h = jnp.dot(x.astype(bf16), p["w1"], preferred_element_type=f32) + p["b1"]
    h = jnp.maximum(h, 0.0)
    mu = jnp.mean(h, axis=-1, keepdims=True)
    var = jnp.mean((h - mu) ** 2, axis=-1, keepdims=True)
    h = (h - mu) * jax.lax.rsqrt(var + 1e-5) * p["gamma"] + p["beta"]
    h = jnp.maximum(jnp.dot(h.astype(bf16), p["w2"],
                            preferred_element_type=f32) + p["b2"], 0.0)
    h = jnp.maximum(jnp.dot(h.astype(bf16), p["w3"],
                            preferred_element_type=f32) + p["b3"], 0.0)
    out = jnp.dot(h.astype(bf16), p["w4"].T,
                  preferred_element_type=f32) + p["b4"]
    return out


if __name__ == "__main__":
    GLOBAL_STATE_SIZE = 32
    HIDDEN_SIZE = 64
    BATCH = 256          # 2 grid steps of 128 rows each -> keeps both v7x TCs busy

    key = jax.random.PRNGKey(0)
    kp, kx = jax.random.split(key)
    params = init_params(kp, GLOBAL_STATE_SIZE, HIDDEN_SIZE)
    x = jax.random.normal(kx, (BATCH, GLOBAL_STATE_SIZE), jnp.float32)

    out = magec_critic_forward(x, params, batch_tile=128)
    out = jax.block_until_ready(out)

    ref = reference_forward(x, params)
    assert out.shape == (BATCH, 1)
    err = float(jnp.max(jnp.abs(out - ref)))
    assert jnp.allclose(out, ref, atol=1e-2, rtol=1e-2), f"max abs err {err}"
    print("KERNEL_OK")
</pallas_src>

<mosaic_0001>
module attributes {stable_mosaic.version = 11 : i64} {
  func.func @critic_kernel(%arg0: i32, %arg1: memref<128x32xf32, #tpu.memory_space<vmem>>, %arg2: memref<32x64xbf16, #tpu.memory_space<vmem>>, %arg3: memref<1x64xf32, #tpu.memory_space<vmem>>, %arg4: memref<1x64xf32, #tpu.memory_space<vmem>>, %arg5: memref<1x64xf32, #tpu.memory_space<vmem>>, %arg6: memref<64x64xbf16, #tpu.memory_space<vmem>>, %arg7: memref<1x64xf32, #tpu.memory_space<vmem>>, %arg8: memref<64x32xbf16, #tpu.memory_space<vmem>>, %arg9: memref<1x32xf32, #tpu.memory_space<vmem>>, %arg10: memref<1x32xbf16, #tpu.memory_space<vmem>>, %arg11: memref<1x1xf32, #tpu.memory_space<vmem>>, %arg12: memref<1x128xf32, #tpu.memory_space<vmem>>) attributes {dimension_semantics = [#tpu.dimension_semantics<parallel>], iteration_bounds = array<i64: 2>, scalar_prefetch = 0 : i64, scratch_operands = 0 : i64, tpu.core_type = #tpu.core_type<tc>, window_params = [{transform_indices = @transform_0, window_bounds = array<i64: 128, 32>}, {pipeline_mode = #tpu.pipeline_mode<synchronous>, transform_indices = @transform_1, window_bounds = array<i64: 32, 64>}, {pipeline_mode = #tpu.pipeline_mode<synchronous>, transform_indices = @transform_2, window_bounds = array<i64: 1, 64>}, {pipeline_mode = #tpu.pipeline_mode<synchronous>, transform_indices = @transform_3, window_bounds = array<i64: 1, 64>}, {pipeline_mode = #tpu.pipeline_mode<synchronous>, transform_indices = @transform_4, window_bounds = array<i64: 1, 64>}, {pipeline_mode = #tpu.pipeline_mode<synchronous>, transform_indices = @transform_5, window_bounds = array<i64: 64, 64>}, {pipeline_mode = #tpu.pipeline_mode<synchronous>, transform_indices = @transform_6, window_bounds = array<i64: 1, 64>}, {pipeline_mode = #tpu.pipeline_mode<synchronous>, transform_indices = @transform_7, window_bounds = array<i64: 64, 32>}, {pipeline_mode = #tpu.pipeline_mode<synchronous>, transform_indices = @transform_8, window_bounds = array<i64: 1, 32>}, {pipeline_mode = #tpu.pipeline_mode<synchronous>, transform_indices = @transform_9, window_bounds = array<i64: 1, 32>}, {pipeline_mode = #tpu.pipeline_mode<synchronous>, transform_indices = @transform_10, window_bounds = array<i64: 1, 1>}, {transform_indices = @transform_11, window_bounds = array<i64: 1, 128>}]} {
    %c0 = arith.constant 0 : index
    %c0_0 = arith.constant 0 : index
    %0 = vector.load %arg1[%c0, %c0_0] : memref<128x32xf32, #tpu.memory_space<vmem>>, vector<128x32xf32>
    %1 = arith.truncf %0 : vector<128x32xf32> to vector<128x32xbf16>
    %c0_1 = arith.constant 0 : index
    %c0_2 = arith.constant 0 : index
    %2 = vector.load %arg2[%c0_1, %c0_2] : memref<32x64xbf16, #tpu.memory_space<vmem>>, vector<32x64xbf16>
    %cst = arith.constant dense<0.000000e+00> : vector<128x64xf32>
    %3 = tpu.matmul %1, %2, %cst {dimension_numbers = #tpu.dot_dimension_numbers<[1], [0], [0], [1], [0, 0, 1, 1], [], []>} : vector<128x32xbf16>, vector<32x64xbf16>, vector<128x64xf32> -> vector<128x64xf32>
    %c0_3 = arith.constant 0 : index
    %c0_4 = arith.constant 0 : index
    %4 = vector.load %arg3[%c0_3, %c0_4] : memref<1x64xf32, #tpu.memory_space<vmem>>, vector<1x64xf32>
    %5 = vector.broadcast %4 : vector<1x64xf32> to vector<128x64xf32>
    %6 = arith.addf %3, %5 : vector<128x64xf32>
    %cst_5 = arith.constant 0.000000e+00 : f32
    %7 = vector.broadcast %cst_5 : f32 to vector<128x64xf32>
    %8 = arith.maximumf %6, %7 : vector<128x64xf32>
    %cst_6 = arith.constant dense<0.000000e+00> : vector<128xf32>
    %9 = vector.multi_reduction <add>, %8, %cst_6 [1] : vector<128x64xf32> to vector<128xf32>
    %10 = vector.shape_cast %9 : vector<128xf32> to vector<128x1xf32>
    %cst_7 = arith.constant 6.400000e+01 : f32
    %11 = vector.broadcast %cst_7 : f32 to vector<128x1xf32>
    %12 = arith.divf %10, %11 : vector<128x1xf32>
    %13 = arith.mulf %8, %8 : vector<128x64xf32>
    %cst_8 = arith.constant dense<0.000000e+00> : vector<128xf32>
    %14 = vector.multi_reduction <add>, %13, %cst_8 [1] : vector<128x64xf32> to vector<128xf32>
    %15 = vector.shape_cast %14 : vector<128xf32> to vector<128x1xf32>
    %cst_9 = arith.constant 6.400000e+01 : f32
    %16 = vector.broadcast %cst_9 : f32 to vector<128x1xf32>
    %17 = arith.divf %15, %16 : vector<128x1xf32>
    %18 = arith.mulf %12, %12 : vector<128x1xf32>
    %19 = arith.subf %17, %18 : vector<128x1xf32>
    %cst_10 = arith.constant 0.000000e+00 : f32
    %20 = vector.broadcast %cst_10 : f32 to vector<128x1xf32>
    %21 = arith.maximumf %19, %20 : vector<128x1xf32>
    %22 = vector.broadcast %12 : vector<128x1xf32> to vector<128x64xf32>
    %23 = arith.subf %8, %22 : vector<128x64xf32>
    %cst_11 = arith.constant 9.99999974E-6 : f32
    %24 = vector.broadcast %cst_11 : f32 to vector<128x1xf32>
    %25 = arith.addf %21, %24 : vector<128x1xf32>
    %26 = math.rsqrt %25 : vector<128x1xf32>
    %27 = vector.broadcast %26 : vector<128x1xf32> to vector<128x64xf32>
    %28 = arith.mulf %23, %27 : vector<128x64xf32>
    %c0_12 = arith.constant 0 : index
    %c0_13 = arith.constant 0 : index
    %29 = vector.load %arg4[%c0_12, %c0_13] : memref<1x64xf32, #tpu.memory_space<vmem>>, vector<1x64xf32>
    %30 = vector.broadcast %29 : vector<1x64xf32> to vector<128x64xf32>
    %31 = arith.mulf %28, %30 : vector<128x64xf32>
    %c0_14 = arith.constant 0 : index
    %c0_15 = arith.constant 0 : index
    %32 = vector.load %arg5[%c0_14, %c0_15] : memref<1x64xf32, #tpu.memory_space<vmem>>, vector<1x64xf32>
    %33 = vector.broadcast %32 : vector<1x64xf32> to vector<128x64xf32>
    %34 = arith.addf %31, %33 : vector<128x64xf32>
    %35 = arith.truncf %34 : vector<128x64xf32> to vector<128x64xbf16>
    %c0_16 = arith.constant 0 : index
    %c0_17 = arith.constant 0 : index
    %36 = vector.load %arg6[%c0_16, %c0_17] : memref<64x64xbf16, #tpu.memory_space<vmem>>, vector<64x64xbf16>
    %cst_18 = arith.constant dense<0.000000e+00> : vector<128x64xf32>
    %37 = tpu.matmul %35, %36, %cst_18 {dimension_numbers = #tpu.dot_dimension_numbers<[1], [0], [0], [1], [0, 0, 1, 1], [], []>} : vector<128x64xbf16>, vector<64x64xbf16>, vector<128x64xf32> -> vector<128x64xf32>
    %c0_19 = arith.constant 0 : index
    %c0_20 = arith.constant 0 : index
    %38 = vector.load %arg7[%c0_19, %c0_20] : memref<1x64xf32, #tpu.memory_space<vmem>>, vector<1x64xf32>
    %39 = vector.broadcast %38 : vector<1x64xf32> to vector<128x64xf32>
    %40 = arith.addf %37, %39 : vector<128x64xf32>
    %cst_21 = arith.constant 0.000000e+00 : f32
    %41 = vector.broadcast %cst_21 : f32 to vector<128x64xf32>
    %42 = arith.maximumf %40, %41 : vector<128x64xf32>
    %43 = arith.truncf %42 : vector<128x64xf32> to vector<128x64xbf16>
    %c0_22 = arith.constant 0 : index
    %c0_23 = arith.constant 0 : index
    %44 = vector.load %arg8[%c0_22, %c0_23] : memref<64x32xbf16, #tpu.memory_space<vmem>>, vector<64x32xbf16>
    %cst_24 = arith.constant dense<0.000000e+00> : vector<128x32xf32>
    %45 = tpu.matmul %43, %44, %cst_24 {dimension_numbers = #tpu.dot_dimension_numbers<[1], [0], [0], [1], [0, 0, 1, 1], [], []>} : vector<128x64xbf16>, vector<64x32xbf16>, vector<128x32xf32> -> vector<128x32xf32>
    %c0_25 = arith.constant 0 : index
    %c0_26 = arith.constant 0 : index
    %46 = vector.load %arg9[%c0_25, %c0_26] : memref<1x32xf32, #tpu.memory_space<vmem>>, vector<1x32xf32>
    %47 = vector.broadcast %46 : vector<1x32xf32> to vector<128x32xf32>
    %48 = arith.addf %45, %47 : vector<128x32xf32>
    %cst_27 = arith.constant 0.000000e+00 : f32
    %49 = vector.broadcast %cst_27 : f32 to vector<128x32xf32>
    %50 = arith.maximumf %48, %49 : vector<128x32xf32>
    %c0_28 = arith.constant 0 : index
    %c0_29 = arith.constant 0 : index
    %51 = vector.load %arg10[%c0_28, %c0_29] : memref<1x32xbf16, #tpu.memory_space<vmem>>, vector<1x32xbf16>
    %52 = arith.truncf %50 : vector<128x32xf32> to vector<128x32xbf16>
    %cst_30 = arith.constant dense<0.000000e+00> : vector<1x128xf32>
    %53 = tpu.matmul %51, %52, %cst_30 {dimension_numbers = #tpu.dot_dimension_numbers<[1], [1], [0], [0], [0, 0, 1, 0], [], []>} : vector<1x32xbf16>, vector<128x32xbf16>, vector<1x128xf32> -> vector<1x128xf32>
    %c0_31 = arith.constant 0 : index
    %c0_32 = arith.constant 0 : index
    %54 = vector.load %arg11[%c0_31, %c0_32] : memref<1x1xf32, #tpu.memory_space<vmem>>, vector<1x1xf32>
    %55 = vector.broadcast %54 : vector<1x1xf32> to vector<1x128xf32>
    %56 = arith.addf %53, %55 : vector<1x128xf32>
    %c0_33 = arith.constant 0 : index
    %c0_34 = arith.constant 0 : index
    %57 = vector.load %arg12[%c0_33, %c0_34] : memref<1x128xf32, #tpu.memory_space<vmem>>, vector<1x128xf32>
    tpu.vector_store %arg12[%c0_33, %c0_34], %56 {strides = array<i32>} : memref<1x128xf32, #tpu.memory_space<vmem>>, vector<1x128xf32>,
    return
  }
  func.func @transform_0(%arg0: i32) -> (i32, i32) {
    %c0_i32 = arith.constant 0 : i32
    %c0_i32_0 = arith.constant 0 : i32
    return %arg0, %c0_i32 : i32, i32
  }
  func.func @transform_1(%arg0: i32) -> (i32, i32) {
    %c0_i32 = arith.constant 0 : i32
    %c0_i32_0 = arith.constant 0 : i32
    %c0_i32_1 = arith.constant 0 : i32
    return %c0_i32, %c0_i32_0 : i32, i32
  }
  func.func @transform_2(%arg0: i32) -> (i32, i32) {
    %c0_i32 = arith.constant 0 : i32
    %c0_i32_0 = arith.constant 0 : i32
    %c0_i32_1 = arith.constant 0 : i32
    return %c0_i32, %c0_i32_0 : i32, i32
  }
  func.func @transform_3(%arg0: i32) -> (i32, i32) {
    %c0_i32 = arith.constant 0 : i32
    %c0_i32_0 = arith.constant 0 : i32
    %c0_i32_1 = arith.constant 0 : i32
    return %c0_i32, %c0_i32_0 : i32, i32
  }
  func.func @transform_4(%arg0: i32) -> (i32, i32) {
    %c0_i32 = arith.constant 0 : i32
    %c0_i32_0 = arith.constant 0 : i32
    %c0_i32_1 = arith.constant 0 : i32
    return %c0_i32, %c0_i32_0 : i32, i32
  }
  func.func @transform_5(%arg0: i32) -> (i32, i32) {
    %c0_i32 = arith.constant 0 : i32
    %c0_i32_0 = arith.constant 0 : i32
    %c0_i32_1 = arith.constant 0 : i32
    return %c0_i32, %c0_i32_0 : i32, i32
  }
  func.func @transform_6(%arg0: i32) -> (i32, i32) {
    %c0_i32 = arith.constant 0 : i32
    %c0_i32_0 = arith.constant 0 : i32
    %c0_i32_1 = arith.constant 0 : i32
    return %c0_i32, %c0_i32_0 : i32, i32
  }
  func.func @transform_7(%arg0: i32) -> (i32, i32) {
    %c0_i32 = arith.constant 0 : i32
    %c0_i32_0 = arith.constant 0 : i32
    %c0_i32_1 = arith.constant 0 : i32
    return %c0_i32, %c0_i32_0 : i32, i32
  }
  func.func @transform_8(%arg0: i32) -> (i32, i32) {
    %c0_i32 = arith.constant 0 : i32
    %c0_i32_0 = arith.constant 0 : i32
    %c0_i32_1 = arith.constant 0 : i32
    return %c0_i32, %c0_i32_0 : i32, i32
  }
  func.func @transform_9(%arg0: i32) -> (i32, i32) {
    %c0_i32 = arith.constant 0 : i32
    %c0_i32_0 = arith.constant 0 : i32
    %c0_i32_1 = arith.constant 0 : i32
    return %c0_i32, %c0_i32_0 : i32, i32
  }
  func.func @transform_10(%arg0: i32) -> (i32, i32) {
    %c0_i32 = arith.constant 0 : i32
    %c0_i32_0 = arith.constant 0 : i32
    %c0_i32_1 = arith.constant 0 : i32
    return %c0_i32, %c0_i32_0 : i32, i32
  }
  func.func @transform_11(%arg0: i32) -> (i32, i32) {
    %c0_i32 = arith.constant 0 : i32
    %c0_i32_0 = arith.constant 0 : i32
    return %c0_i32, %arg0 : i32, i32
  }
}

</mosaic_0001>

<llo_original>
// kernel: tpu_custom_call.1
$region0: #{tpu_custom_call.1}
  #allocation0 [shape = 'u32[]', space=smem, size = 0x4, offset = 0x4, fixed_abs, tag = 'smem constant byte address 0x4 - core index']
  #allocation1 [shape = 'u32[144,128]{1,0:T(1,128)}', space=vmem, size = 0x12000, scoped, tag = 'internal scratch']
  #allocation2 [shape = 'f32[1,1]{1,0:T(1,128)S(1)}', space=vmem, size = 0x200, scoped, tag = 'scoped memory for tpu_custom_call.1']
  %s0 = inlined_call_operand.vmem [shape: f32[256,32], index: 0, kind: input, shape index: {}]
  %s1 = inlined_call_operand.vmem [shape: bf16[32,64], index: 1, kind: input, shape index: {}]
  %s2 = inlined_call_operand.vmem [shape: f32[1,64], index: 2, kind: input, shape index: {}]
  %s3 = inlined_call_operand.vmem [shape: f32[1,64], index: 3, kind: input, shape index: {}]
  %s4 = inlined_call_operand.vmem [shape: f32[1,64], index: 4, kind: input, shape index: {}]
  %s5 = inlined_call_operand.vmem [shape: bf16[64,64], index: 5, kind: input, shape index: {}]
  %s6 = inlined_call_operand.vmem [shape: f32[1,64], index: 6, kind: input, shape index: {}]
  %s7 = inlined_call_operand.vmem [shape: bf16[64,32], index: 7, kind: input, shape index: {}]
  %s8 = inlined_call_operand.vmem [shape: f32[1,32], index: 8, kind: input, shape index: {}]
  %s9 = inlined_call_operand.vmem [shape: bf16[1,32], index: 9, kind: input, shape index: {}]
  %s10 = inlined_call_operand.<no memory space> [shape: f32[1,1], index: 10, kind: input, shape index: {}]
  %s11 = inlined_call_operand.hbm [shape: f32[1,256], index: 11, kind: output, shape index: {}]
  %s12 = sld [smem:[#allocation0]]
  $region77: #{tpu_custom_call.1} parent=0
    _
  %s14 = ssub.s32 1, %s12
  %s15 = scalar_select 0, %s14, %s12
  %v16 = vstv %s10
  %17 = vst [vmem:[#allocation2] sm:$0x1] %v16
  $region1: #{tpu_custom_call.1} parent=0
    #allocation3 [shape = 'u8[1024]{0}', space=vmem, size = 0x400, scoped, tag = 'output window, operand 0']
    #allocation4 [shape = 's32[2]{0}', space=sflag, size = 0x8, scoped, tag = 'scoped memory for tpu_custom_call.1']
    %18 = vsyncpa [#allocation4], 0
    %s19 = scalar_lea.sflag [#allocation4], 1
    %20 = vsyncpa %s19, 0
    loop: start=0, step=1, limit=4
    $region2: #{tpu_custom_call.1} parent=1 // loop_pre_header
      _
    $region3: #{tpu_custom_call.1} parent=1 // loop_header
      %s22 = sphi 0, %s26
      %p23 = scmp.ge.s32.totalorder %s22, 4
      %s32 = sphi 0, %s34
      %s35 = sphi 0, %s32
      %s36 = sphi 0, %s35
      %s52 = sphi 0, %s36
      %s56 = sphi 0, %s56
      %s58 = sphi 0, %s56
      %s59 = sphi 0, %s58
      %s73 = sphi 0, %s59
      %s77 = sphi 0, %s77
      %s79 = sphi 0, %s77
      %s80 = sphi 0, %s79
      %s94 = sphi 0, %s80
      %s98 = sphi 0, %s98
      %s100 = sphi 0, %s98
      %s101 = sphi 0, %s100
      %s115 = sphi 0, %s101
      %s119 = sphi 0, %s119
      %s121 = sphi 0, %s119
      %s122 = sphi 0, %s121
      %s136 = sphi 0, %s122
      %s140 = sphi 0, %s140
      %s142 = sphi 0, %s140
      %s143 = sphi 0, %s142
      %s157 = sphi 0, %s143
      %s161 = sphi 0, %s161
      %s163 = sphi 0, %s161
      %s164 = sphi 0, %s163
      %s178 = sphi 0, %s164
      %s182 = sphi 0, %s182
      %s184 = sphi 0, %s182
      %s185 = sphi 0, %s184
      %s199 = sphi 0, %s185
      %s203 = sphi 0, %s203
      %s205 = sphi 0, %s203
      %s206 = sphi 0, %s205
      %s220 = sphi 0, %s206
      %s224 = sphi 0, %s224
      %s226 = sphi 0, %s224
      %s227 = sphi 0, %s226
      %s241 = sphi 0, %s227
      %s245 = sphi 0, %s245
      %s247 = sphi 0, %s245
      %s248 = sphi 0, %s247
      %s262 = sphi 0, %s248
      %s268 = sphi 0, %s270
      %s271 = sphi 0, %s268
      %s272 = sphi 0, %s271
      %s288 = sphi 0, %s272
    $region4: #{tpu_custom_call.1} parent=1 // loop_header_branch
      %25 = sbr.rel (%p23) target = $region8
    $region5: #{tpu_custom_call.1} parent=1 // loop_body
      %s27 = ssub.s32 %s22, 1
      %s28 = ssub.s32 %s22, 2
      %s29 = sadd.s32 %s22, 1
      %s30 = ssub.s32 %s22, %s29
      %p31 = scmp.eq.s32.totalorder %s30, 0
      %s33 = sadd.s32 %s32, 1
      %s34 = scalar_select %p31, %s32, %s33
      %p37 = pneg %p31
      %p38 = scmp.eq.s32.totalorder %s22, 1
      %p39 = por %p37, %p38
      %p40 = scmp.ne.s32.totalorder %s32, %s35
      %p41 = scmp.eq.s32.totalorder %s22, 0
      %p42 = por %p40, %p41
      %p43 = scmp.ne.s32.totalorder %s32, %s35
      %p44 = scmp.eq.s32.totalorder %s27, 1
      %p45 = por %p43, %p44
      %p46 = scmp.ne.s32.totalorder %s35, %s36
      %p47 = scmp.eq.s32.totalorder %s27, 0
      %p48 = por %p46, %p47
      %p49 = scmp.ne.s32.totalorder %s35, %s36
      %p50 = scmp.eq.s32.totalorder %s28, 1
      %p51 = por %p49, %p50
      %p53 = scmp.ne.s32.totalorder %s36, %s52
      %p54 = scmp.eq.s32.totalorder %s28, 0
      %p55 = por %p53, %p54
      %s57 = sadd.s32 %s56, 1
      %p60 = scmp.eq.s32.totalorder %s22, 1
      %p61 = scmp.ne.s32.totalorder %s56, %s58
      %p62 = scmp.eq.s32.totalorder %s22, 0
      %p63 = por %p61, %p62
      %p64 = scmp.ne.s32.totalorder %s56, %s58
      %p65 = scmp.eq.s32.totalorder %s27, 1
      %p66 = por %p64, %p65
      %p67 = scmp.ne.s32.totalorder %s58, %s59
      %p68 = scmp.eq.s32.totalorder %s27, 0
      %p69 = por %p67, %p68
      %p70 = scmp.ne.s32.totalorder %s58, %s59
      %p71 = scmp.eq.s32.totalorder %s28, 1
      %p72 = por %p70, %p71
      %p74 = scmp.ne.s32.totalorder %s59, %s73
      %p75 = scmp.eq.s32.totalorder %s28, 0
      %p76 = por %p74, %p75
      %s78 = sadd.s32 %s77, 1
      %p81 = scmp.eq.s32.totalorder %s22, 1
      %p82 = scmp.ne.s32.totalorder %s77, %s79
      %p83 = scmp.eq.s32.totalorder %s22, 0
      %p84 = por %p82, %p83
      %p85 = scmp.ne.s32.totalorder %s77, %s79
      %p86 = scmp.eq.s32.totalorder %s27, 1
      %p87 = por %p85, %p86
      %p88 = scmp.ne.s32.totalorder %s79, %s80
      %p89 = scmp.eq.s32.totalorder %s27, 0
      %p90 = por %p88, %p89
      %p91 = scmp.ne.s32.totalorder %s79, %s80
      %p92 = scmp.eq.s32.totalorder %s28, 1
      %p93 = por %p91, %p92
      %p95 = scmp.ne.s32.totalorder %s80, %s94
      %p96 = scmp.eq.s32.totalorder %s28, 0
      %p97 = por %p95, %p96
      %s99 = sadd.s32 %s98, 1
      %p102 = scmp.eq.s32.totalorder %s22, 1
      %p103 = scmp.ne.s32.totalorder %s98, %s100
      %p104 = scmp.eq.s32.totalorder %s22, 0
      %p105 = por %p103, %p104
      %p106 = scmp.ne.s32.totalorder %s98, %s100
      %p107 = scmp.eq.s32.totalorder %s27, 1
      %p108 = por %p106, %p107
      %p109 = scmp.ne.s32.totalorder %s100, %s101
      %p110 = scmp.eq.s32.totalorder %s27, 0
      %p111 = por %p109, %p110
      %p112 = scmp.ne.s32.totalorder %s100, %s101
      %p113 = scmp.eq.s32.totalorder %s28, 1
      %p114 = por %p112, %p113
      %p116 = scmp.ne.s32.totalorder %s101, %s115
      %p117 = scmp.eq.s32.totalorder %s28, 0
      %p118 = por %p116, %p117
      %s120 = sadd.s32 %s119, 1
      %p123 = scmp.eq.s32.totalorder %s22, 1
      %p124 = scmp.ne.s32.totalorder %s119, %s121
      %p125 = scmp.eq.s32.totalorder %s22, 0
      %p126 = por %p124, %p125
      %p127 = scmp.ne.s32.totalorder %s119, %s121
      %p128 = scmp.eq.s32.totalorder %s27, 1
      %p129 = por %p127, %p128
      %p130 = scmp.ne.s32.totalorder %s121, %s122
      %p131 = scmp.eq.s32.totalorder %s27, 0
      %p132 = por %p130, %p131
      %p133 = scmp.ne.s32.totalorder %s121, %s122
      %p134 = scmp.eq.s32.totalorder %s28, 1
      %p135 = por %p133, %p134
      %p137 = scmp.ne.s32.totalorder %s122, %s136
      %p138 = scmp.eq.s32.totalorder %s28, 0
      %p139 = por %p137, %p138
      %s141 = sadd.s32 %s140, 1
      %p144 = scmp.eq.s32.totalorder %s22, 1
      %p145 = scmp.ne.s32.totalorder %s140, %s142
      %p146 = scmp.eq.s32.totalorder %s22, 0
      %p147 = por %p145, %p146
      %p148 = scmp.ne.s32.totalorder %s140, %s142
      %p149 = scmp.eq.s32.totalorder %s27, 1
      %p150 = por %p148, %p149
      %p151 = scmp.ne.s32.totalorder %s142, %s143
      %p152 = scmp.eq.s32.totalorder %s27, 0
      %p153 = por %p151, %p152
      %p154 = scmp.ne.s32.totalorder %s142, %s143
      %p155 = scmp.eq.s32.totalorder %s28, 1
      %p156 = por %p154, %p155
      %p158 = scmp.ne.s32.totalorder %s143, %s157
      %p159 = scmp.eq.s32.totalorder %s28, 0
      %p160 = por %p158, %p159
      %s162 = sadd.s32 %s161, 1
      %p165 = scmp.eq.s32.totalorder %s22, 1
      %p166 = scmp.ne.s32.totalorder %s161, %s163
      %p167 = scmp.eq.s32.totalorder %s22, 0
      %p168 = por %p166, %p167
      %p169 = scmp.ne.s32.totalorder %s161, %s163
      %p170 = scmp.eq.s32.totalorder %s27, 1
      %p171 = por %p169, %p170
      %p172 = scmp.ne.s32.totalorder %s163, %s164
      %p173 = scmp.eq.s32.totalorder %s27, 0
      %p174 = por %p172, %p173
      %p175 = scmp.ne.s32.totalorder %s163, %s164
      %p176 = scmp.eq.s32.totalorder %s28, 1
      %p177 = por %p175, %p176
      %p179 = scmp.ne.s32.totalorder %s164, %s178
      %p180 = scmp.eq.s32.totalorder %s28, 0
      %p181 = por %p179, %p180
      %s183 = sadd.s32 %s182, 1
      %p186 = scmp.eq.s32.totalorder %s22, 1
      %p187 = scmp.ne.s32.totalorder %s182, %s184
      %p188 = scmp.eq.s32.totalorder %s22, 0
      %p189 = por %p187, %p188
      %p190 = scmp.ne.s32.totalorder %s182, %s184
      %p191 = scmp.eq.s32.totalorder %s27, 1
      %p192 = por %p190, %p191
      %p193 = scmp.ne.s32.totalorder %s184, %s185
      %p194 = scmp.eq.s32.totalorder %s27, 0
      %p195 = por %p193, %p194
      %p196 = scmp.ne.s32.totalorder %s184, %s185
      %p197 = scmp.eq.s32.totalorder %s28, 1
      %p198 = por %p196, %p197
      %p200 = scmp.ne.s32.totalorder %s185, %s199
      %p201 = scmp.eq.s32.totalorder %s28, 0
      %p202 = por %p200, %p201
      %s204 = sadd.s32 %s203, 1
      %p207 = scmp.eq.s32.totalorder %s22, 1
      %p208 = scmp.ne.s32.totalorder %s203, %s205
      %p209 = scmp.eq.s32.totalorder %s22, 0
      %p210 = por %p208, %p209
      %p211 = scmp.ne.s32.totalorder %s203, %s205
      %p212 = scmp.eq.s32.totalorder %s27, 1
      %p213 = por %p211, %p212
      %p214 = scmp.ne.s32.totalorder %s205, %s206
      %p215 = scmp.eq.s32.totalorder %s27, 0
      %p216 = por %p214, %p215
      %p217 = scmp.ne.s32.totalorder %s205, %s206
      %p218 = scmp.eq.s32.totalorder %s28, 1
      %p219 = por %p217, %p218
      %p221 = scmp.ne.s32.totalorder %s206, %s220
      %p222 = scmp.eq.s32.totalorder %s28, 0
      %p223 = por %p221, %p222
      %s225 = sadd.s32 %s224, 1
      %p228 = scmp.eq.s32.totalorder %s22, 1
      %p229 = scmp.ne.s32.totalorder %s224, %s226
      %p230 = scmp.eq.s32.totalorder %s22, 0
      %p231 = por %p229, %p230
      %p232 = scmp.ne.s32.totalorder %s224, %s226
      %p233 = scmp.eq.s32.totalorder %s27, 1
      %p234 = por %p232, %p233
      %p235 = scmp.ne.s32.totalorder %s226, %s227
      %p236 = scmp.eq.s32.totalorder %s27, 0
      %p237 = por %p235, %p236
      %p238 = scmp.ne.s32.totalorder %s226, %s227
      %p239 = scmp.eq.s32.totalorder %s28, 1
      %p240 = por %p238, %p239
      %p242 = scmp.ne.s32.totalorder %s227, %s241
      %p243 = scmp.eq.s32.totalorder %s28, 0
      %p244 = por %p242, %p243
      %s246 = sadd.s32 %s245, 1
      %p249 = scmp.eq.s32.totalorder %s22, 1
      %p250 = scmp.ne.s32.totalorder %s245, %s247
      %p251 = scmp.eq.s32.totalorder %s22, 0
      %p252 = por %p250, %p251
      %p253 = scmp.ne.s32.totalorder %s245, %s247
      %p254 = scmp.eq.s32.totalorder %s27, 1
      %p255 = por %p253, %p254
      %p256 = scmp.ne.s32.totalorder %s247, %s248
      %p257 = scmp.eq.s32.totalorder %s27, 0
      %p258 = por %p256, %p257
      %p259 = scmp.ne.s32.totalorder %s247, %s248
      %p260 = scmp.eq.s32.totalorder %s28, 1
      %p261 = por %p259, %p260
      %p263 = scmp.ne.s32.totalorder %s248, %s262
      %p264 = scmp.eq.s32.totalorder %s28, 0
      %p265 = por %p263, %p264
      %s266 = ssub.s32 %s22, %s29
      %p267 = scmp.eq.s32.totalorder %s266, 0
      %s269 = sadd.s32 %s268, 1
      %s270 = scalar_select %p267, %s268, %s269
      %p273 = pneg %p267
      %p274 = scmp.eq.s32.totalorder %s22, 1
      %p275 = por %p273, %p274
      %p276 = scmp.ne.s32.totalorder %s268, %s271
      %p277 = scmp.eq.s32.totalorder %s22, 0
      %p278 = por %p276, %p277
      %p279 = scmp.ne.s32.totalorder %s268, %s271
      %p280 = scmp.eq.s32.totalorder %s27, 1
      %p281 = por %p279, %p280
      %p282 = scmp.ne.s32.totalorder %s271, %s272
      %p283 = scmp.eq.s32.totalorder %s27, 0
      %p284 = por %p282, %p283
      %p285 = scmp.ne.s32.totalorder %s271, %s272
      %p286 = scmp.eq.s32.totalorder %s28, 1
      %p287 = por %p285, %p286
      %p289 = scmp.ne.s32.totalorder %s272, %s288
      %p290 = scmp.eq.s32.totalorder %s28, 0
      %p291 = por %p289, %p290
      %p292 = scmp.le.s32.totalorder 1, %s22
      %p293 = scmp.lt.s32.totalorder %s22, 3
      %p294 = pnand %p292, %p293
      %p295 = pneg %p294
      // Predicated region
      $region9: #{tpu_custom_call.1} parent=5 // pred_check
        _
      $region10: #{tpu_custom_call.1} parent=5 // pred_check_branch
        %297 = sbr.rel (%p294) target = $region12
      $region11: #{tpu_custom_call.1} parent=5 // pred_region
        %s298 = ssub.s32 %s22, 1
        // Predicated region
        $region13: #{tpu_custom_call.1} parent=11 // pred_check
          %p299 = pneg %p69
        $region14: #{tpu_custom_call.1} parent=11 // pred_check_branch
          %301 = sbr.rel (%p299) target = $region16
        $region15: #{tpu_custom_call.1} parent=11 // pred_region
          _
        $region16: #{tpu_custom_call.1} parent=11 // pred_fallthru
          _
        // Predicated region
        $region17: #{tpu_custom_call.1} parent=11 // pred_check
          %p302 = pneg %p90
        $region18: #{tpu_custom_call.1} parent=11 // pred_check_branch
          %304 = sbr.rel (%p302) target = $region20
        $region19: #{tpu_custom_call.1} parent=11 // pred_region
          _
        $region20: #{tpu_custom_call.1} parent=11 // pred_fallthru
          _
        // Predicated region
        $region21: #{tpu_custom_call.1} parent=11 // pred_check
          %p305 = pneg %p111
        $region22: #{tpu_custom_call.1} parent=11 // pred_check_branch
          %307 = sbr.rel (%p305) target = $region24
        $region23: #{tpu_custom_call.1} parent=11 // pred_region
          _
        $region24: #{tpu_custom_call.1} parent=11 // pred_fallthru
          _
        // Predicated region
        $region25: #{tpu_custom_call.1} parent=11 // pred_check
          %p308 = pneg %p132
        $region26: #{tpu_custom_call.1} parent=11 // pred_check_branch
          %310 = sbr.rel (%p308) target = $region28
        $region27: #{tpu_custom_call.1} parent=11 // pred_region
          _
        $region28: #{tpu_custom_call.1} parent=11 // pred_fallthru
          _
        // Predicated region
        $region29: #{tpu_custom_call.1} parent=11 // pred_check
          %p311 = pneg %p153
        $region30: #{tpu_custom_call.1} parent=11 // pred_check_branch
          %313 = sbr.rel (%p311) target = $region32
        $region31: #{tpu_custom_call.1} parent=11 // pred_region
          _
        $region32: #{tpu_custom_call.1} parent=11 // pred_fallthru
          _
        // Predicated region
        $region33: #{tpu_custom_call.1} parent=11 // pred_check
          %p314 = pneg %p174
        $region34: #{tpu_custom_call.1} parent=11 // pred_check_branch
          %316 = sbr.rel (%p314) target = $region36
        $region35: #{tpu_custom_call.1} parent=11 // pred_region
          _
        $region36: #{tpu_custom_call.1} parent=11 // pred_fallthru
          _
        // Predicated region
        $region37: #{tpu_custom_call.1} parent=11 // pred_check
          %p317 = pneg %p195
        $region38: #{tpu_custom_call.1} parent=11 // pred_check_branch
          %319 = sbr.rel (%p317) target = $region40
        $region39: #{tpu_custom_call.1} parent=11 // pred_region
          _
        $region40: #{tpu_custom_call.1} parent=11 // pred_fallthru
          _
        // Predicated region
        $region41: #{tpu_custom_call.1} parent=11 // pred_check
          %p320 = pneg %p216
        $region42: #{tpu_custom_call.1} parent=11 // pred_check_branch
          %322 = sbr.rel (%p320) target = $region44
        $region43: #{tpu_custom_call.1} parent=11 // pred_region
          _
        $region44: #{tpu_custom_call.1} parent=11 // pred_fallthru
          _
        // Predicated region
        $region45: #{tpu_custom_call.1} parent=11 // pred_check
          %p323 = pneg %p237
        $region46: #{tpu_custom_call.1} parent=11 // pred_check_branch
          %325 = sbr.rel (%p323) target = $region48
        $region47: #{tpu_custom_call.1} parent=11 // pred_region
          _
        $region48: #{tpu_custom_call.1} parent=11 // pred_fallthru
          _
        // Predicated region
        $region49: #{tpu_custom_call.1} parent=11 // pred_check
          %p326 = pneg %p258
        $region50: #{tpu_custom_call.1} parent=11 // pred_check_branch
          %328 = sbr.rel (%p326) target = $region52
        $region51: #{tpu_custom_call.1} parent=11 // pred_region
          _
        $region52: #{tpu_custom_call.1} parent=11 // pred_fallthru
          _
      $region12: #{tpu_custom_call.1} parent=5 // pred_fallthru
        _
      %p329 = scmp.lt.s32.totalorder %s22, 2
      // Predicated region
      $region53: #{tpu_custom_call.1} parent=5 // pred_check
        %p330 = pneg %p329
      $region54: #{tpu_custom_call.1} parent=5 // pred_check_branch
        %332 = sbr.rel (%p330) target = $region56
      $region55: #{tpu_custom_call.1} parent=5 // pred_region
        // Predicated region
        $region57: #{tpu_custom_call.1} parent=55 // pred_check
          %p333 = pneg %p42
        $region58: #{tpu_custom_call.1} parent=55 // pred_check_branch
          %335 = sbr.rel (%p333) target = $region60
        $region59: #{tpu_custom_call.1} parent=55 // pred_region
          %s336 = smul.u32 16, %s22
          %p337 = scmp.lt.s32.totalorder %s336, 31
          %s338 = scalar_select %p337, %s336, 31
          %s339 = smul.addr %s338, 8
          %s340 = scalar_lea.vmem %s0, %s339
          %s341 = smul.u32 16, %s22
        $region60: #{tpu_custom_call.1} parent=55 // pred_fallthru
          _
      $region56: #{tpu_custom_call.1} parent=5 // pred_fallthru
        _
      %p342 = scmp.le.s32.totalorder 1, %s22
      %p343 = scmp.lt.s32.totalorder %s22, 3
      %p344 = pnand %p342, %p343
      %p345 = pneg %p344
      // Predicated region
      $region61: #{tpu_custom_call.1} parent=5 // pred_check
        _
      $region62: #{tpu_custom_call.1} parent=5 // pred_check_branch
        %347 = sbr.rel (%p344) target = $region64
      $region63: #{tpu_custom_call.1} parent=5 // pred_region
        %s348 = ssub.s32 %s22, 1
        %s349 = smul.u32 16, %s27
        %p350 = scmp.lt.s32.totalorder %s349, 31
        %s351 = scalar_select %p350, %s349, 31
        %s352 = smul.addr %s351, 8
        %s353 = scalar_lea.vmem %s0, %s352
        %p354 = pneg %p48
        %p355 = pneg %p45
        %p356 = pneg %p69
        %p357 = pneg %p66
        %p358 = pneg %p90
        %p359 = pneg %p87
        %p360 = pneg %p111
        %p361 = pneg %p108
        %p362 = pneg %p132
        %p363 = pneg %p129
        %p364 = pneg %p153
        %p365 = pneg %p150
        %p366 = pneg %p174
        %p367 = pneg %p171
        %p368 = pneg %p195
        %p369 = pneg %p192
        %p370 = pneg %p216
        %p371 = pneg %p213
        %p372 = pneg %p237
        %p373 = pneg %p234
        %p374 = pneg %p258
        %p375 = pneg %p255
        %p376 = pneg %p284
        %p377 = pneg %p281
        %s378 = sand.u32 %s271, 1
        %s379 = scalar_lea.sflag [#allocation4], %s378
        %s380 = sand.u32 %s271, 1
        %s381 = scalar_lea.vmem [#allocation3], %s380
        %s382 = smul.u32 16, %s27
        %p383 = scmp.lt.s32.totalorder %s382, 31
        %s384 = scalar_select %p383, %s382, 31
        %s385 = smul.addr %s384, 8
        %s386 = scalar_lea.vmem %s0, %s385
        %s387 = smul.u32 16, %s27
        %v389 = vld [vmem:[%s386] sm:$0xff]
        %v390 = vld [vmem:[%s386 + $0x8] sm:$0xff]
        %v391 = vld [vmem:[%s386 + $0x10] sm:$0xff]
        %v392 = vld [vmem:[%s386 + $0x18] sm:$0xff]
        %v393 = vld [vmem:[%s386 + $0x20] sm:$0xff]
        %v394 = vld [vmem:[%s386 + $0x28] sm:$0xff]
        %v395 = vld [vmem:[%s386 + $0x30] sm:$0xff]
        %v396 = vld [vmem:[%s386 + $0x38] sm:$0xff]
        %v397 = vld [vmem:[%s386 + $0x40] sm:$0xff]
        %v398 = vld [vmem:[%s386 + $0x48] sm:$0xff]
        %v399 = vld [vmem:[%s386 + $0x50] sm:$0xff]
        %v400 = vld [vmem:[%s386 + $0x58] sm:$0xff]
        %v401 = vld [vmem:[%s386 + $0x60] sm:$0xff]
        %v402 = vld [vmem:[%s386 + $0x68] sm:$0xff]
        %v403 = vld [vmem:[%s386 + $0x70] sm:$0xff]
        %v404 = vld [vmem:[%s386 + $0x78] sm:$0xff]
        %v405 = vpack.c.bf16 %v390, %v389
        %v406 = vpack.c.bf16 %v392, %v391
        %v407 = vpack.c.bf16 %v394, %v393
        %v408 = vpack.c.bf16 %v396, %v395
        %v409 = vpack.c.bf16 %v398, %v397
        %v410 = vpack.c.bf16 %v400, %v399
        %v411 = vpack.c.bf16 %v402, %v401
        %v412 = vpack.c.bf16 %v404, %v403
        %v413 = vld [vmem:[%s1] sm:$0xf]
        %v414 = vld [vmem:[%s1 + $0x4] sm:$0xf]
        %v415 = vld [vmem:[%s1 + $0x8] sm:$0xf]
        %v416 = vld [vmem:[%s1 + $0xc] sm:$0xf]
        %v417 = vld [vmem:[%s2] sm:$0x1]
        %v419 = vlaneseq
        %v420 = vshrl.u32 %v419, 7
        %v421 = vsub.s32 0, %v420
        %v422 = vrot.slane %v417, %v421
        %v428 = vunpack.c.l.b16 %v413
        %v429 = vunpack.c.l.b16 %v414
        %v430 = vunpack.c.l.b16 %v415
        %v431 = vunpack.c.l.b16 %v416
        %v432 = vpack.c.b16 %v429, %v428
        %v433 = vpack.c.b16 %v431, %v430
        %vm436 = vcmask 261120
        %v438 = vsel %vm436, %v405, 0
        %v441 = vsel %vm436, %v406, 0
        %v444 = vsel %vm436, %v407, 0
        %v447 = vsel %vm436, %v408, 0
        %v450 = vsel %vm436, %v409, 0
        %v453 = vsel %vm436, %v410, 0
        %v456 = vsel %vm436, %v411, 0
        %v459 = vsel %vm436, %v412, 0
        %461 = vmatprep.subr.bf16.mxu0 0
        %462 = vmatpush1.bf16.msra.mxu0 %v432
        %463 = vmatprep.subr.bf16.mxu0 0
        %464 = vmatpush1.bf16.msra.mxu0 %v433
        %465 = vmatprep.subr.bf16.mxu0 0
        %466 = vmatpush1.bf16.msra.mxu0 0
        %467 = vmatprep.subr.bf16.mxu0 0
        %468 = vmatpush1.bf16.msra.mxu0 0
        %469 = vmatprep.subr.bf16.mxu0 0
        %470 = vmatpush1.bf16.msra.mxu0 0
        %471 = vmatprep.subr.bf16.mxu0 0
        %472 = vmatpush1.bf16.msra.mxu0 0
        %473 = vmatprep.subr.bf16.mxu0 0
        %474 = vmatpush1.bf16.msra.mxu0 0
        %475 = vmatprep.subr.bf16.mxu0 0
        %476 = vmatpush1.bf16.msra.mxu0 0
        %477 = vmatprep.subr.bf16.mxu0 0
        %478 = vmatpush1.bf16.msra.mxu0 0
        %479 = vmatprep.subr.bf16.mxu0 0
        %480 = vmatpush1.bf16.msra.mxu0 0
        %481 = vmatprep.subr.bf16.mxu0 0
        %482 = vmatpush1.bf16.msra.mxu0 0
        %483 = vmatprep.subr.bf16.mxu0 0
        %484 = vmatpush1.bf16.msra.mxu0 0
        %485 = vmatprep.subr.bf16.mxu0 0
        %486 = vmatpush1.bf16.msra.mxu0 0
        %487 = vmatprep.subr.bf16.mxu0 0
        %488 = vmatpush1.bf16.msra.mxu0 0
        %489 = vmatprep.subr.bf16.mxu0 0
        %490 = vmatpush1.bf16.msra.mxu0 0
        %491 = vmatprep.subr.bf16.mxu0 0
        %492 = vmatpush1.bf16.msra.mxu0 0
        %493 = vmatprep.mubr.bf16.mxu0 0
        %494 = vmatmul.mubr.bf16.gmra.mrb[0].mxu0 %v438
        %v495 = vpop.f32.mrb[0].mxu0
        %v496 = vadd.f32 %v422, %v495
        %v497 = vpop.f32.mrb[0].mxu0
        %v498 = vpop.f32.mrb[0].mxu0
        %v499 = vadd.f32 %v422, %v498
        %v500 = vpop.f32.mrb[0].mxu0
        %501 = vmatprep.mubr.bf16.mxu0 0
        %502 = vmatmul.mubr.bf16.gmra.mrb[0].mxu0 %v441
        %v503 = vpop.f32.mrb[0].mxu0
        %v504 = vadd.f32 %v422, %v503
        %v505 = vpop.f32.mrb[0].mxu0
        %v506 = vpop.f32.mrb[0].mxu0
        %v507 = vadd.f32 %v422, %v506
        %v508 = vpop.f32.mrb[0].mxu0
        %509 = vmatprep.mubr.bf16.mxu0 0
        %510 = vmatmul.mubr.bf16.gmra.mrb[0].mxu0 %v444
        %v511 = vpop.f32.mrb[0].mxu0
        %v512 = vadd.f32 %v422, %v511
        %v513 = vpop.f32.mrb[0].mxu0
        %v514 = vpop.f32.mrb[0].mxu0
        %v515 = vadd.f32 %v422, %v514
        %v516 = vpop.f32.mrb[0].mxu0
        %517 = vmatprep.mubr.bf16.mxu0 0
        %518 = vmatmul.mubr.bf16.gmra.mrb[0].mxu0 %v447
        %v519 = vpop.f32.mrb[0].mxu0
        %v520 = vadd.f32 %v422, %v519
        %v521 = vpop.f32.mrb[0].mxu0
        %v522 = vpop.f32.mrb[0].mxu0
        %v523 = vadd.f32 %v422, %v522
        %v524 = vpop.f32.mrb[0].mxu0
        %525 = vmatprep.mubr.bf16.mxu0 0
        %526 = vmatmul.mubr.bf16.gmra.mrb[0].mxu0 %v450
        %v527 = vpop.f32.mrb[0].mxu0
        %v528 = vadd.f32 %v422, %v527
        %v529 = vpop.f32.mrb[0].mxu0
        %v530 = vpop.f32.mrb[0].mxu0
        %v531 = vadd.f32 %v422, %v530
        %v532 = vpop.f32.mrb[0].mxu0
        %533 = vmatprep.mubr.bf16.mxu0 0
        %534 = vmatmul.mubr.bf16.gmra.mrb[0].mxu0 %v453
        %v535 = vpop.f32.mrb[0].mxu0
        %v536 = vadd.f32 %v422, %v535
        %v537 = vpop.f32.mrb[0].mxu0
        %v538 = vpop.f32.mrb[0].mxu0
        %v539 = vadd.f32 %v422, %v538
        %v540 = vpop.f32.mrb[0].mxu0
        %541 = vmatprep.mubr.bf16.mxu0 0
        %542 = vmatmul.mubr.bf16.gmra.mrb[0].mxu0 %v456
        %v543 = vpop.f32.mrb[0].mxu0
        %v544 = vadd.f32 %v422, %v543
        %v545 = vpop.f32.mrb[0].mxu0
        %v546 = vpop.f32.mrb[0].mxu0
        %v547 = vadd.f32 %v422, %v546
        %v548 = vpop.f32.mrb[0].mxu0
        %549 = vmatprep.mubr.bf16.mxu0 0
        %550 = vmatmul.mubr.bf16.gmra.mrb[0].mxu0 %v459
        %v551 = vpop.f32.mrb[0].mxu0
        %v552 = vadd.f32 %v422, %v551
        %v553 = vpop.f32.mrb[0].mxu0
        %v554 = vpop.f32.mrb[0].mxu0
        %v555 = vadd.f32 %v422, %v554
        %v556 = vpop.f32.mrb[0].mxu0
        %557 = vdwg.mxu0
        %v558 = vmax.f32 %v496, 0.0
        %v559 = vmax.f32 %v499, 0.0
        %v560 = vmax.f32 %v504, 0.0
        %v561 = vmax.f32 %v507, 0.0
        %v562 = vmax.f32 %v512, 0.0
        %v563 = vmax.f32 %v515, 0.0
        %v564 = vmax.f32 %v520, 0.0
        %v565 = vmax.f32 %v523, 0.0
        %v566 = vmax.f32 %v528, 0.0
        %v567 = vmax.f32 %v531, 0.0
        %v568 = vmax.f32 %v536, 0.0
        %v569 = vmax.f32 %v539, 0.0
        %v570 = vmax.f32 %v544, 0.0
        %v571 = vmax.f32 %v547, 0.0
        %v572 = vmax.f32 %v552, 0.0
        %v573 = vmax.f32 %v555, 0.0
        %vm574 = vcmask 523264
        %v575 = vsel %vm574, %v558, 0.0
        %576 = vadd.xlane.f32.xlu0 %v575
        %v577 = vpop.xlane.xlu0 %576
        %v578 = vsel %vm574, %v559, 0.0
        %579 = vadd.xlane.f32.xlu0 %v578
        %v580 = vpop.xlane.xlu0 %579
        %v581 = vsel %vm574, %v560, 0.0
        %582 = vadd.xlane.f32.xlu0 %v581
        %v583 = vpop.xlane.xlu0 %582
        %v584 = vsel %vm574, %v561, 0.0
        %585 = vadd.xlane.f32.xlu0 %v584
        %v586 = vpop.xlane.xlu0 %585
        %v587 = vsel %vm574, %v562, 0.0
        %588 = vadd.xlane.f32.xlu0 %v587
        %v589 = vpop.xlane.xlu0 %588
        %v590 = vsel %vm574, %v563, 0.0
        %591 = vadd.xlane.f32.xlu0 %v590
        %v592 = vpop.xlane.xlu0 %591
        %v593 = vsel %vm574, %v564, 0.0
        %594 = vadd.xlane.f32.xlu0 %v593
        %v595 = vpop.xlane.xlu0 %594
        %v596 = vsel %vm574, %v565, 0.0
        %597 = vadd.xlane.f32.xlu0 %v596
        %v598 = vpop.xlane.xlu0 %597
        %v599 = vsel %vm574, %v566, 0.0
        %600 = vadd.xlane.f32.xlu0 %v599
        %v601 = vpop.xlane.xlu0 %600
        %v602 = vsel %vm574, %v567, 0.0
        %603 = vadd.xlane.f32.xlu0 %v602
        %v604 = vpop.xlane.xlu0 %603
        %v605 = vsel %vm574, %v568, 0.0
        %606 = vadd.xlane.f32.xlu0 %v605
        %v607 = vpop.xlane.xlu0 %606
        %v608 = vsel %vm574, %v569, 0.0
        %609 = vadd.xlane.f32.xlu0 %v608
        %v610 = vpop.xlane.xlu0 %609
        %v611 = vsel %vm574, %v570, 0.0
        %612 = vadd.xlane.f32.xlu0 %v611
        %v613 = vpop.xlane.xlu0 %612
        %v614 = vsel %vm574, %v571, 0.0
        %615 = vadd.xlane.f32.xlu0 %v614
        %v616 = vpop.xlane.xlu0 %615
        %v617 = vsel %vm574, %v572, 0.0
        %618 = vadd.xlane.f32.xlu0 %v617
        %v619 = vpop.xlane.xlu0 %618
        %v620 = vsel %vm574, %v573, 0.0
        %621 = vadd.xlane.f32.xlu0 %v620
        %v622 = vpop.xlane.xlu0 %621
        %v623 = vrcp.pop 64.0
        %v624 = vmul.f32 %v577, %v623
        %v625 = vmul.f32 %v580, %v623
        %v626 = vmul.f32 %v583, %v623
        %v627 = vmul.f32 %v586, %v623
        %v628 = vmul.f32 %v589, %v623
        %v629 = vmul.f32 %v592, %v623
        %v630 = vmul.f32 %v595, %v623
        %v631 = vmul.f32 %v598, %v623
        %v632 = vmul.f32 %v601, %v623
        %v633 = vmul.f32 %v604, %v623
        %v634 = vmul.f32 %v607, %v623
        %v635 = vmul.f32 %v610, %v623
        %v636 = vmul.f32 %v613, %v623
        %v637 = vmul.f32 %v616, %v623
        %v638 = vmul.f32 %v619, %v623
        %v639 = vmul.f32 %v622, %v623
        %v640 = vmul.f32 %v558, %v558
        %v641 = vmul.f32 %v559, %v559
        %v642 = vmul.f32 %v560, %v560
        %v643 = vmul.f32 %v561, %v561
        %v644 = vmul.f32 %v562, %v562
        %v645 = vmul.f32 %v563, %v563
        %v646 = vmul.f32 %v564, %v564
        %v647 = vmul.f32 %v565, %v565
        %v648 = vmul.f32 %v566, %v566
        %v649 = vmul.f32 %v567, %v567
        %v650 = vmul.f32 %v568, %v568
        %v651 = vmul.f32 %v569, %v569
        %v652 = vmul.f32 %v570, %v570
        %v653 = vmul.f32 %v571, %v571
        %v654 = vmul.f32 %v572, %v572
        %v655 = vmul.f32 %v573, %v573
        %v656 = vsel %vm574, %v640, 0.0
        %657 = vadd.xlane.f32.xlu0 %v656
        %v658 = vpop.xlane.xlu0 %657
        %v659 = vsel %vm574, %v641, 0.0
        %660 = vadd.xlane.f32.xlu0 %v659
        %v661 = vpop.xlane.xlu0 %660
        %v662 = vsel %vm574, %v642, 0.0
        %663 = vadd.xlane.f32.xlu0 %v662
        %v664 = vpop.xlane.xlu0 %663
        %v665 = vsel %vm574, %v643, 0.0
        %666 = vadd.xlane.f32.xlu0 %v665
        %v667 = vpop.xlane.xlu0 %666
        %v668 = vsel %vm574, %v644, 0.0
        %669 = vadd.xlane.f32.xlu0 %v668
        %v670 = vpop.xlane.xlu0 %669
        %v671 = vsel %vm574, %v645, 0.0
        %672 = vadd.xlane.f32.xlu0 %v671
        %v673 = vpop.xlane.xlu0 %672
        %v674 = vsel %vm574, %v646, 0.0
        %675 = vadd.xlane.f32.xlu0 %v674
        %v676 = vpop.xlane.xlu0 %675
        %v677 = vsel %vm574, %v647, 0.0
        %678 = vadd.xlane.f32.xlu0 %v677
        %v679 = vpop.xlane.xlu0 %678
        %v680 = vsel %vm574, %v648, 0.0
        %681 = vadd.xlane.f32.xlu0 %v680
        %v682 = vpop.xlane.xlu0 %681
        %v683 = vsel %vm574, %v649, 0.0
        %684 = vadd.xlane.f32.xlu0 %v683
        %v685 = vpop.xlane.xlu0 %684
        %v686 = vsel %vm574, %v650, 0.0
        %687 = vadd.xlane.f32.xlu0 %v686
        %v688 = vpop.xlane.xlu0 %687
        %v689 = vsel %vm574, %v651, 0.0
        %690 = vadd.xlane.f32.xlu0 %v689
        %v691 = vpop.xlane.xlu0 %690
        %v692 = vsel %vm574, %v652, 0.0
        %693 = vadd.xlane.f32.xlu0 %v692
        %v694 = vpop.xlane.xlu0 %693
        %v695 = vsel %vm574, %v653, 0.0
        %696 = vadd.xlane.f32.xlu0 %v695
        %v697 = vpop.xlane.xlu0 %696
        %v698 = vsel %vm574, %v654, 0.0
        %699 = vadd.xlane.f32.xlu0 %v698
        %v700 = vpop.xlane.xlu0 %699
        %v701 = vsel %vm574, %v655, 0.0
        %702 = vadd.xlane.f32.xlu0 %v701
        %v703 = vpop.xlane.xlu0 %702
        %v704 = vmul.f32 %v658, %v623
        %v705 = vmul.f32 %v661, %v623
        %v706 = vmul.f32 %v664, %v623
        %v707 = vmul.f32 %v667, %v623
        %v708 = vmul.f32 %v670, %v623
        %v709 = vmul.f32 %v673, %v623
        %v710 = vmul.f32 %v676, %v623
        %v711 = vmul.f32 %v679, %v623
        %v712 = vmul.f32 %v682, %v623
        %v713 = vmul.f32 %v685, %v623
        %v714 = vmul.f32 %v688, %v623
        %v715 = vmul.f32 %v691, %v623
        %v716 = vmul.f32 %v694, %v623
        %v717 = vmul.f32 %v697, %v623
        %v718 = vmul.f32 %v700, %v623
        %v719 = vmul.f32 %v703, %v623
        %v720 = vmul.f32 %v624, %v624
        %v721 = vmul.f32 %v625, %v625
        %v722 = vmul.f32 %v626, %v626
        %v723 = vmul.f32 %v627, %v627
        %v724 = vmul.f32 %v628, %v628
        %v725 = vmul.f32 %v629, %v629
        %v726 = vmul.f32 %v630, %v630
        %v727 = vmul.f32 %v631, %v631
        %v728 = vmul.f32 %v632, %v632
        %v729 = vmul.f32 %v633, %v633
        %v730 = vmul.f32 %v634, %v634
        %v731 = vmul.f32 %v635, %v635
        %v732 = vmul.f32 %v636, %v636
        %v733 = vmul.f32 %v637, %v637
        %v734 = vmul.f32 %v638, %v638
        %v735 = vmul.f32 %v639, %v639
        %v736 = vsub.f32 %v704, %v720
        %v737 = vsub.f32 %v705, %v721
        %v738 = vsub.f32 %v706, %v722
        %v739 = vsub.f32 %v707, %v723
        %v740 = vsub.f32 %v708, %v724
        %v741 = vsub.f32 %v709, %v725
        %v742 = vsub.f32 %v710, %v726
        %v743 = vsub.f32 %v711, %v727
        %v744 = vsub.f32 %v712, %v728
        %v745 = vsub.f32 %v713, %v729
        %v746 = vsub.f32 %v714, %v730
        %v747 = vsub.f32 %v715, %v731
        %v748 = vsub.f32 %v716, %v732
        %v749 = vsub.f32 %v717, %v733
        %v750 = vsub.f32 %v718, %v734
        %v751 = vsub.f32 %v719, %v735
        %v752 = vmax.f32 %v736, 0.0
        %v753 = vmax.f32 %v737, 0.0
        %v754 = vmax.f32 %v738, 0.0
        %v755 = vmax.f32 %v739, 0.0
        %v756 = vmax.f32 %v740, 0.0
        %v757 = vmax.f32 %v741, 0.0
        %v758 = vmax.f32 %v742, 0.0
        %v759 = vmax.f32 %v743, 0.0
        %v760 = vmax.f32 %v744, 0.0
        %v761 = vmax.f32 %v745, 0.0
        %v762 = vmax.f32 %v746, 0.0
        %v763 = vmax.f32 %v747, 0.0
        %v764 = vmax.f32 %v748, 0.0
        %v765 = vmax.f32 %v749, 0.0
        %v766 = vmax.f32 %v750, 0.0
        %v767 = vmax.f32 %v751, 0.0
        %v768 = vsub.f32 %v558, %v624
        %v769 = vsub.f32 %v559, %v625
        %v770 = vsub.f32 %v560, %v626
        %v771 = vsub.f32 %v561, %v627
        %v772 = vsub.f32 %v562, %v628
        %v773 = vsub.f32 %v563, %v629
        %v774 = vsub.f32 %v564, %v630
        %v775 = vsub.f32 %v565, %v631
        %v776 = vsub.f32 %v566, %v632
        %v777 = vsub.f32 %v567, %v633
        %v778 = vsub.f32 %v568, %v634
        %v779 = vsub.f32 %v569, %v635
        %v780 = vsub.f32 %v570, %v636
        %v781 = vsub.f32 %v571, %v637
        %v782 = vsub.f32 %v572, %v638
        %v783 = vsub.f32 %v573, %v639
        %v784 = vadd.f32 %v752, 1e-05
        %v785 = vadd.f32 %v753, 1e-05
        %v786 = vadd.f32 %v754, 1e-05
        %v787 = vadd.f32 %v755, 1e-05
        %v788 = vadd.f32 %v756, 1e-05
        %v789 = vadd.f32 %v757, 1e-05
        %v790 = vadd.f32 %v758, 1e-05
        %v791 = vadd.f32 %v759, 1e-05
        %v792 = vadd.f32 %v760, 1e-05
        %v793 = vadd.f32 %v761, 1e-05
        %v794 = vadd.f32 %v762, 1e-05
        %v795 = vadd.f32 %v763, 1e-05
        %v796 = vadd.f32 %v764, 1e-05
        %v797 = vadd.f32 %v765, 1e-05
        %v798 = vadd.f32 %v766, 1e-05
        %v799 = vadd.f32 %v767, 1e-05
        %v800 = vrsqrt.pop %v784
        %v801 = vrsqrt.pop %v785
        %v802 = vrsqrt.pop %v786
        %v803 = vrsqrt.pop %v787
        %v804 = vrsqrt.pop %v788
        %v805 = vrsqrt.pop %v789
        %v806 = vrsqrt.pop %v790
        %v807 = vrsqrt.pop %v791
        %v808 = vrsqrt.pop %v792
        %v809 = vrsqrt.pop %v793
        %v810 = vrsqrt.pop %v794
        %v811 = vrsqrt.pop %v795
        %v812 = vrsqrt.pop %v796
        %v813 = vrsqrt.pop %v797
        %v814 = vrsqrt.pop %v798
        %v815 = vrsqrt.pop %v799
        %v816 = vmul.f32 %v768, %v800
        %v817 = vmul.f32 %v769, %v801
        %v818 = vmul.f32 %v770, %v802
        %v819 = vmul.f32 %v771, %v803
        %v820 = vmul.f32 %v772, %v804
        %v821 = vmul.f32 %v773, %v805
        %v822 = vmul.f32 %v774, %v806
        %v823 = vmul.f32 %v775, %v807
        %v824 = vmul.f32 %v776, %v808
        %v825 = vmul.f32 %v777, %v809
        %v826 = vmul.f32 %v778, %v810
        %v827 = vmul.f32 %v779, %v811
        %v828 = vmul.f32 %v780, %v812
        %v829 = vmul.f32 %v781, %v813
        %v830 = vmul.f32 %v782, %v814
        %v831 = vmul.f32 %v783, %v815
        %v832 = vld [vmem:[%s3] sm:$0x1]
        %v834 = vlaneseq
        %v835 = vshrl.u32 %v834, 7
        %v836 = vsub.s32 0, %v835
        %v837 = vrot.slane %v832, %v836
        %v839 = vmul.f32 %v816, %v837
        %v840 = vmul.f32 %v817, %v837
        %v841 = vmul.f32 %v818, %v837
        %v842 = vmul.f32 %v819, %v837
        %v843 = vmul.f32 %v820, %v837
        %v844 = vmul.f32 %v821, %v837
        %v845 = vmul.f32 %v822, %v837
        %v846 = vmul.f32 %v823, %v837
        %v847 = vmul.f32 %v824, %v837
        %v848 = vmul.f32 %v825, %v837
        %v849 = vmul.f32 %v826, %v837
        %v850 = vmul.f32 %v827, %v837
        %v851 = vmul.f32 %v828, %v837
        %v852 = vmul.f32 %v829, %v837
        %v853 = vmul.f32 %v830, %v837
        %v854 = vmul.f32 %v831, %v837
        %v855 = vld [vmem:[%s4] sm:$0x1]
        %v857 = vlaneseq
        %v858 = vshrl.u32 %v857, 7
        %v859 = vsub.s32 0, %v858
        %v860 = vrot.slane %v855, %v859
        %v862 = vadd.f32 %v839, %v860
        %v863 = vadd.f32 %v840, %v860
        %v864 = vadd.f32 %v841, %v860
        %v865 = vadd.f32 %v842, %v860
        %v866 = vadd.f32 %v843, %v860
        %v867 = vadd.f32 %v844, %v860
        %v868 = vadd.f32 %v845, %v860
        %v869 = vadd.f32 %v846, %v860
        %v870 = vadd.f32 %v847, %v860
        %v871 = vadd.f32 %v848, %v860
        %v872 = vadd.f32 %v849, %v860
        %v873 = vadd.f32 %v850, %v860
        %v874 = vadd.f32 %v851, %v860
        %v875 = vadd.f32 %v852, %v860
        %v876 = vadd.f32 %v853, %v860
        %v877 = vadd.f32 %v854, %v860
        %v878 = vpack.c.bf16 %v863, %v862
        %v879 = vpack.c.bf16 %v865, %v864
        %v880 = vpack.c.bf16 %v867, %v866
        %v881 = vpack.c.bf16 %v869, %v868
        %v882 = vpack.c.bf16 %v871, %v870
        %v883 = vpack.c.bf16 %v873, %v872
        %v884 = vpack.c.bf16 %v875, %v874
        %v885 = vpack.c.bf16 %v877, %v876
        %v886 = vld [vmem:[%s5] sm:$0xf]
        %v887 = vld [vmem:[%s5 + $0x4] sm:$0xf]
        %v888 = vld [vmem:[%s5 + $0x8] sm:$0xf]
        %v889 = vld [vmem:[%s5 + $0xc] sm:$0xf]
        %v890 = vld [vmem:[%s5 + $0x10] sm:$0xf]
        %v891 = vld [vmem:[%s5 + $0x14] sm:$0xf]
        %v892 = vld [vmem:[%s5 + $0x18] sm:$0xf]
        %v893 = vld [vmem:[%s5 + $0x1c] sm:$0xf]
        %v894 = vld [vmem:[%s6] sm:$0x1]
        %v896 = vlaneseq
        %v897 = vshrl.u32 %v896, 7
        %v898 = vsub.s32 0, %v897
        %v899 = vrot.slane %v894, %v898
        %v909 = vunpack.c.l.b16 %v886
        %v910 = vunpack.c.l.b16 %v887
        %v911 = vunpack.c.l.b16 %v888
        %v912 = vunpack.c.l.b16 %v889
        %v913 = vunpack.c.l.b16 %v890
        %v914 = vunpack.c.l.b16 %v891
        %v915 = vunpack.c.l.b16 %v892
        %v916 = vunpack.c.l.b16 %v893
        %v917 = vpack.c.b16 %v910, %v909
        %v918 = vpack.c.b16 %v912, %v911
        %v919 = vpack.c.b16 %v914, %v913
        %v920 = vpack.c.b16 %v916, %v915
        %v926 = vsel %vm574, %v878, 0
        %v929 = vsel %vm574, %v879, 0
        %v932 = vsel %vm574, %v880, 0
        %v935 = vsel %vm574, %v881, 0
        %v938 = vsel %vm574, %v882, 0
        %v941 = vsel %vm574, %v883, 0
        %v944 = vsel %vm574, %v884, 0
        %v947 = vsel %vm574, %v885, 0
        %949 = vmatprep.subr.bf16.mxu0 0
        %950 = vmatpush1.bf16.msra.mxu0 %v917
        %951 = vmatprep.subr.bf16.mxu0 0
        %952 = vmatpush1.bf16.msra.mxu0 %v918
        %953 = vmatprep.subr.bf16.mxu0 0
        %954 = vmatpush1.bf16.msra.mxu0 %v919
        %955 = vmatprep.subr.bf16.mxu0 0
        %956 = vmatpush1.bf16.msra.mxu0 %v920
        %957 = vmatprep.subr.bf16.mxu0 0
        %958 = vmatpush1.bf16.msra.mxu0 0
        %959 = vmatprep.subr.bf16.mxu0 0
        %960 = vmatpush1.bf16.msra.mxu0 0
        %961 = vmatprep.subr.bf16.mxu0 0
        %962 = vmatpush1.bf16.msra.mxu0 0
        %963 = vmatprep.subr.bf16.mxu0 0
        %964 = vmatpush1.bf16.msra.mxu0 0
        %965 = vmatprep.subr.bf16.mxu0 0
        %966 = vmatpush1.bf16.msra.mxu0 0
        %967 = vmatprep.subr.bf16.mxu0 0
        %968 = vmatpush1.bf16.msra.mxu0 0
        %969 = vmatprep.subr.bf16.mxu0 0
        %970 = vmatpush1.bf16.msra.mxu0 0
        %971 = vmatprep.subr.bf16.mxu0 0
        %972 = vmatpush1.bf16.msra.mxu0 0
        %973 = vmatprep.subr.bf16.mxu0 0
        %974 = vmatpush1.bf16.msra.mxu0 0
        %975 = vmatprep.subr.bf16.mxu0 0
        %976 = vmatpush1.bf16.msra.mxu0 0
        %977 = vmatprep.subr.bf16.mxu0 0
        %978 = vmatpush1.bf16.msra.mxu0 0
        %979 = vmatprep.subr.bf16.mxu0 0
        %980 = vmatpush1.bf16.msra.mxu0 0
        %981 = vmatprep.mubr.bf16.mxu0 0
        %982 = vmatmul.mubr.bf16.gmra.mrb[0].mxu0 %v926
        %v983 = vpop.f32.mrb[0].mxu0
        %v984 = vadd.f32 %v899, %v983
        %v985 = vpop.f32.mrb[0].mxu0
        %v986 = vpop.f32.mrb[0].mxu0
        %v987 = vadd.f32 %v899, %v986
        %v988 = vpop.f32.mrb[0].mxu0
        %989 = vmatprep.mubr.bf16.mxu0 0
        %990 = vmatmul.mubr.bf16.gmra.mrb[0].mxu0 %v929
        %v991 = vpop.f32.mrb[0].mxu0
        %v992 = vadd.f32 %v899, %v991
        %v993 = vpop.f32.mrb[0].mxu0
        %v994 = vpop.f32.mrb[0].mxu0
        %v995 = vadd.f32 %v899, %v994
        %v996 = vpop.f32.mrb[0].mxu0
        %997 = vmatprep.mubr.bf16.mxu0 0
        %998 = vmatmul.mubr.bf16.gmra.mrb[0].mxu0 %v932
        %v999 = vpop.f32.mrb[0].mxu0
        %v1000 = vadd.f32 %v899, %v999
        %v1001 = vpop.f32.mrb[0].mxu0
        %v1002 = vpop.f32.mrb[0].mxu0
        %v1003 = vadd.f32 %v899, %v1002
        %v1004 = vpop.f32.mrb[0].mxu0
        %1005 = vmatprep.mubr.bf16.mxu0 0
        %1006 = vmatmul.mubr.bf16.gmra.mrb[0].mxu0 %v935
        %v1007 = vpop.f32.mrb[0].mxu0
        %v1008 = vadd.f32 %v899, %v1007
        %v1009 = vpop.f32.mrb[0].mxu0
        %v1010 = vpop.f32.mrb[0].mxu0
        %v1011 = vadd.f32 %v899, %v1010
        %v1012 = vpop.f32.mrb[0].mxu0
        %1013 = vmatprep.mubr.bf16.mxu0 0
        %1014 = vmatmul.mubr.bf16.gmra.mrb[0].mxu0 %v938
        %v1015 = vpop.f32.mrb[0].mxu0
        %v1016 = vadd.f32 %v899, %v1015
        %v1017 = vpop.f32.mrb[0].mxu0
        %v1018 = vpop.f32.mrb[0].mxu0
        %v1019 = vadd.f32 %v899, %v1018
        %v1020 = vpop.f32.mrb[0].mxu0
        %1021 = vmatprep.mubr.bf16.mxu0 0
        %1022 = vmatmul.mubr.bf16.gmra.mrb[0].mxu0 %v941
        %v1023 = vpop.f32.mrb[0].mxu0
        %v1024 = vadd.f32 %v899, %v1023
        %v1025 = vpop.f32.mrb[0].mxu0
        %v1026 = vpop.f32.mrb[0].mxu0
        %v1027 = vadd.f32 %v899, %v1026
        %v1028 = vpop.f32.mrb[0].mxu0
        %1029 = vmatprep.mubr.bf16.mxu0 0
        %1030 = vmatmul.mubr.bf16.gmra.mrb[0].mxu0 %v944
        %v1031 = vpop.f32.mrb[0].mxu0
        %v1032 = vadd.f32 %v899, %v1031
        %v1033 = vpop.f32.mrb[0].mxu0
        %v1034 = vpop.f32.mrb[0].mxu0
        %v1035 = vadd.f32 %v899, %v1034
        %v1036 = vpop.f32.mrb[0].mxu0
        %1037 = vmatprep.mubr.bf16.mxu0 0
        %1038 = vmatmul.mubr.bf16.gmra.mrb[0].mxu0 %v947
        %v1039 = vpop.f32.mrb[0].mxu0
        %v1040 = vadd.f32 %v899, %v1039
        %v1041 = vpop.f32.mrb[0].mxu0
        %v1042 = vpop.f32.mrb[0].mxu0
        %v1043 = vadd.f32 %v899, %v1042
        %v1044 = vpop.f32.mrb[0].mxu0
        %1045 = vdwg.mxu0
        %v1046 = vmax.f32 %v984, 0.0
        %v1047 = vmax.f32 %v987, 0.0
        %v1048 = vmax.f32 %v992, 0.0
        %v1049 = vmax.f32 %v995, 0.0
        %v1050 = vmax.f32 %v1000, 0.0
        %v1051 = vmax.f32 %v1003, 0.0
        %v1052 = vmax.f32 %v1008, 0.0
        %v1053 = vmax.f32 %v1011, 0.0
        %v1054 = vmax.f32 %v1016, 0.0
        %v1055 = vmax.f32 %v1019, 0.0
        %v1056 = vmax.f32 %v1024, 0.0
        %v1057 = vmax.f32 %v1027, 0.0
        %v1058 = vmax.f32 %v1032, 0.0
        %v1059 = vmax.f32 %v1035, 0.0
        %v1060 = vmax.f32 %v1040, 0.0
        %v1061 = vmax.f32 %v1043, 0.0
        %v1062 = vpack.c.bf16 %v1047, %v1046
        %v1063 = vpack.c.bf16 %v1049, %v1048
        %v1064 = vpack.c.bf16 %v1051, %v1050
        %v1065 = vpack.c.bf16 %v1053, %v1052
        %v1066 = vpack.c.bf16 %v1055, %v1054
        %v1067 = vpack.c.bf16 %v1057, %v1056
        %v1068 = vpack.c.bf16 %v1059, %v1058
        %v1069 = vpack.c.bf16 %v1061, %v1060
        %v1070 = vld [vmem:[%s7] sm:$0xf]
        %v1071 = vld [vmem:[%s7 + $0x4] sm:$0xf]
        %v1072 = vld [vmem:[%s7 + $0x8] sm:$0xf]
        %v1073 = vld [vmem:[%s7 + $0xc] sm:$0xf]
        %v1074 = vld [vmem:[%s7 + $0x10] sm:$0xf]
        %v1075 = vld [vmem:[%s7 + $0x14] sm:$0xf]
        %v1076 = vld [vmem:[%s7 + $0x18] sm:$0xf]
        %v1077 = vld [vmem:[%s7 + $0x1c] sm:$0xf]
        %v1078 = vld [vmem:[%s8] sm:$0x1]
        %v1080 = vlaneseq
        %v1081 = vshrl.u32 %v1080, 7
        %v1082 = vsub.s32 0, %v1081
        %v1083 = vrot.slane %v1078, %v1082
        %v1093 = vunpack.c.l.b16 %v1070
        %v1094 = vunpack.c.l.b16 %v1071
        %v1095 = vunpack.c.l.b16 %v1072
        %v1096 = vunpack.c.l.b16 %v1073
        %v1097 = vunpack.c.l.b16 %v1074
        %v1098 = vunpack.c.l.b16 %v1075
        %v1099 = vunpack.c.l.b16 %v1076
        %v1100 = vunpack.c.l.b16 %v1077
        %v1101 = vpack.c.b16 %v1094, %v1093
        %v1102 = vpack.c.b16 %v1096, %v1095
        %v1103 = vpack.c.b16 %v1098, %v1097
        %v1104 = vpack.c.b16 %v1100, %v1099
        %v1110 = vsel %vm574, %v1062, 0
        %v1113 = vsel %vm574, %v1063, 0
        %v1116 = vsel %vm574, %v1064, 0
        %v1119 = vsel %vm574, %v1065, 0
        %v1122 = vsel %vm574, %v1066, 0
        %v1125 = vsel %vm574, %v1067, 0
        %v1128 = vsel %vm574, %v1068, 0
        %v1131 = vsel %vm574, %v1069, 0
        %1133 = vmatprep.subr.bf16.mxu0 0
        %1134 = vmatpush1.bf16.msra.mxu0 %v1101
        %1135 = vmatprep.subr.bf16.mxu0 0
        %1136 = vmatpush1.bf16.msra.mxu0 %v1102
        %1137 = vmatprep.subr.bf16.mxu0 0
        %1138 = vmatpush1.bf16.msra.mxu0 %v1103
        %1139 = vmatprep.subr.bf16.mxu0 0
        %1140 = vmatpush1.bf16.msra.mxu0 %v1104
        %1141 = vmatprep.subr.bf16.mxu0 0
        %1142 = vmatpush1.bf16.msra.mxu0 0
        %1143 = vmatprep.subr.bf16.mxu0 0
        %1144 = vmatpush1.bf16.msra.mxu0 0
        %1145 = vmatprep.subr.bf16.mxu0 0
        %1146 = vmatpush1.bf16.msra.mxu0 0
        %1147 = vmatprep.subr.bf16.mxu0 0
        %1148 = vmatpush1.bf16.msra.mxu0 0
        %1149 = vmatprep.subr.bf16.mxu0 0
        %1150 = vmatpush1.bf16.msra.mxu0 0
        %1151 = vmatprep.subr.bf16.mxu0 0
        %1152 = vmatpush1.bf16.msra.mxu0 0
        %1153 = vmatprep.subr.bf16.mxu0 0
        %1154 = vmatpush1.bf16.msra.mxu0 0
        %1155 = vmatprep.subr.bf16.mxu0 0
        %1156 = vmatpush1.bf16.msra.mxu0 0
        %1157 = vmatprep.subr.bf16.mxu0 0
        %1158 = vmatpush1.bf16.msra.mxu0 0
        %1159 = vmatprep.subr.bf16.mxu0 0
        %1160 = vmatpush1.bf16.msra.mxu0 0
        %1161 = vmatprep.subr.bf16.mxu0 0
        %1162 = vmatpush1.bf16.msra.mxu0 0
        %1163 = vmatprep.subr.bf16.mxu0 0
        %1164 = vmatpush1.bf16.msra.mxu0 0
        %1165 = vmatprep.mubr.bf16.mxu0 0
        %1166 = vmatmul.mubr.bf16.gmra.mrb[0].mxu0 %v1110
        %v1167 = vpop.f32.mrb[0].mxu0
        %v1168 = vadd.f32 %v1083, %v1167
        %v1169 = vpop.f32.mrb[0].mxu0
        %v1170 = vpop.f32.mrb[0].mxu0
        %v1171 = vadd.f32 %v1083, %v1170
        %v1172 = vpop.f32.mrb[0].mxu0
        %1173 = vmatprep.mubr.bf16.mxu0 0
        %1174 = vmatmul.mubr.bf16.gmra.mrb[0].mxu0 %v1113
        %v1175 = vpop.f32.mrb[0].mxu0
        %v1176 = vadd.f32 %v1083, %v1175
        %v1177 = vpop.f32.mrb[0].mxu0
        %v1178 = vpop.f32.mrb[0].mxu0
        %v1179 = vadd.f32 %v1083, %v1178
        %v1180 = vpop.f32.mrb[0].mxu0
        %1181 = vmatprep.mubr.bf16.mxu0 0
        %1182 = vmatmul.mubr.bf16.gmra.mrb[0].mxu0 %v1116
        %v1183 = vpop.f32.mrb[0].mxu0
        %v1184 = vadd.f32 %v1083, %v1183
        %v1185 = vpop.f32.mrb[0].mxu0
        %v1186 = vpop.f32.mrb[0].mxu0
        %v1187 = vadd.f32 %v1083, %v1186
        %v1188 = vpop.f32.mrb[0].mxu0
        %1189 = vmatprep.mubr.bf16.mxu0 0
        %1190 = vmatmul.mubr.bf16.gmra.mrb[0].mxu0 %v1119
        %v1191 = vpop.f32.mrb[0].mxu0
        %v1192 = vadd.f32 %v1083, %v1191
        %v1193 = vpop.f32.mrb[0].mxu0
        %v1194 = vpop.f32.mrb[0].mxu0
        %v1195 = vadd.f32 %v1083, %v1194
        %v1196 = vpop.f32.mrb[0].mxu0
        %1197 = vmatprep.mubr.bf16.mxu0 0
        %1198 = vmatmul.mubr.bf16.gmra.mrb[0].mxu0 %v1122
        %v1199 = vpop.f32.mrb[0].mxu0
        %v1200 = vadd.f32 %v1083, %v1199
        %v1201 = vpop.f32.mrb[0].mxu0
        %v1202 = vpop.f32.mrb[0].mxu0
        %v1203 = vadd.f32 %v1083, %v1202
        %v1204 = vpop.f32.mrb[0].mxu0
        %1205 = vmatprep.mubr.bf16.mxu0 0
        %1206 = vmatmul.mubr.bf16.gmra.mrb[0].mxu0 %v1125
        %v1207 = vpop.f32.mrb[0].mxu0
        %v1208 = vadd.f32 %v1083, %v1207
        %v1209 = vpop.f32.mrb[0].mxu0
        %v1210 = vpop.f32.mrb[0].mxu0
        %v1211 = vadd.f32 %v1083, %v1210
        %v1212 = vpop.f32.mrb[0].mxu0
        %1213 = vmatprep.mubr.bf16.mxu0 0
        %1214 = vmatmul.mubr.bf16.gmra.mrb[0].mxu0 %v1128
        %v1215 = vpop.f32.mrb[0].mxu0
        %v1216 = vadd.f32 %v1083, %v1215
        %v1217 = vpop.f32.mrb[0].mxu0
        %v1218 = vpop.f32.mrb[0].mxu0
        %v1219 = vadd.f32 %v1083, %v1218
        %v1220 = vpop.f32.mrb[0].mxu0
        %1221 = vmatprep.mubr.bf16.mxu0 0
        %1222 = vmatmul.mubr.bf16.gmra.mrb[0].mxu0 %v1131
        %v1223 = vpop.f32.mrb[0].mxu0
        %v1224 = vadd.f32 %v1083, %v1223
        %v1225 = vpop.f32.mrb[0].mxu0
        %v1226 = vpop.f32.mrb[0].mxu0
        %v1227 = vadd.f32 %v1083, %v1226
        %v1228 = vpop.f32.mrb[0].mxu0
        %1229 = vdwg.mxu0
        %v1230 = vmax.f32 %v1168, 0.0
        %v1231 = vmax.f32 %v1171, 0.0
        %v1232 = vmax.f32 %v1176, 0.0
        %v1233 = vmax.f32 %v1179, 0.0
        %v1234 = vmax.f32 %v1184, 0.0
        %v1235 = vmax.f32 %v1187, 0.0
        %v1236 = vmax.f32 %v1192, 0.0
        %v1237 = vmax.f32 %v1195, 0.0
        %v1238 = vmax.f32 %v1200, 0.0
        %v1239 = vmax.f32 %v1203, 0.0
        %v1240 = vmax.f32 %v1208, 0.0
        %v1241 = vmax.f32 %v1211, 0.0
        %v1242 = vmax.f32 %v1216, 0.0
        %v1243 = vmax.f32 %v1219, 0.0
        %v1244 = vmax.f32 %v1224, 0.0
        %v1245 = vmax.f32 %v1227, 0.0
        %v1246 = vld [vmem:[%s9] sm:$0x1]
        %v1247 = vpack.c.bf16 %v1231, %v1230
        %v1248 = vpack.c.bf16 %v1233, %v1232
        %v1249 = vpack.c.bf16 %v1235, %v1234
        %v1250 = vpack.c.bf16 %v1237, %v1236
        %v1251 = vpack.c.bf16 %v1239, %v1238
        %v1252 = vpack.c.bf16 %v1241, %v1240
        %v1253 = vpack.c.bf16 %v1243, %v1242
        %v1254 = vpack.c.bf16 %v1245, %v1244
        %v1255 = vld [vmem:[#allocation2] sm:$0x1]
        %1257 = vset.pattern.permute.xlu0 0
        %1258 = vperm.xlu0 %1257, %v1255
        %v1259 = vpop.permute.xlu0 %1258
        %v1261 = vlaneseq
        %v1262 = vshrl.u32 %v1261, 7
        %v1263 = vsub.s32 0, %v1262
        %v1264 = vrot.slane %v1259, %v1263
        %v1266 = vsel %vm436, %v1246, 0
        %v1269 = vsel %vm436, %v1247, 0
        %v1272 = vsel %vm436, %v1248, 0
        %v1275 = vsel %vm436, %v1249, 0
        %v1278 = vsel %vm436, %v1250, 0
        %v1281 = vsel %vm436, %v1251, 0
        %v1284 = vsel %vm436, %v1252, 0
        %v1287 = vsel %vm436, %v1253, 0
        %v1290 = vsel %vm436, %v1254, 0
        %1292 = vmatprep.subr.bf16.mxu0 0
        %1293 = vmatpush1.bf16.xpose.msra.mxu0 %v1269
        %1294 = vmatprep.subr.bf16.mxu0 0
        %1295 = vmatpush1.bf16.xpose.msra.mxu0 %v1272
        %1296 = vmatprep.subr.bf16.mxu0 0
        %1297 = vmatpush1.bf16.xpose.msra.mxu0 %v1275
        %1298 = vmatprep.subr.bf16.mxu0 0
        %1299 = vmatpush1.bf16.xpose.msra.mxu0 %v1278
        %1300 = vmatprep.subr.bf16.mxu0 0
        %1301 = vmatpush1.bf16.xpose.msra.mxu0 %v1281
        %1302 = vmatprep.subr.bf16.mxu0 0
        %1303 = vmatpush1.bf16.xpose.msra.mxu0 %v1284
        %1304 = vmatprep.subr.bf16.mxu0 0
        %1305 = vmatpush1.bf16.xpose.msra.mxu0 %v1287
        %1306 = vmatprep.subr.bf16.mxu0 0
        %1307 = vmatpush1.bf16.xpose.msra.mxu0 %v1290
        %1308 = vmatprep.subr.bf16.mxu0 0
        %1309 = vmatpush1.bf16.xpose.msra.mxu0 0
        %1310 = vmatprep.subr.bf16.mxu0 0
        %1311 = vmatpush1.bf16.xpose.msra.mxu0 0
        %1312 = vmatprep.subr.bf16.mxu0 0
        %1313 = vmatpush1.bf16.xpose.msra.mxu0 0
        %1314 = vmatprep.subr.bf16.mxu0 0
        %1315 = vmatpush1.bf16.xpose.msra.mxu0 0
        %1316 = vmatprep.subr.bf16.mxu0 0
        %1317 = vmatpush1.bf16.xpose.msra.mxu0 0
        %1318 = vmatprep.subr.bf16.mxu0 0
        %1319 = vmatpush1.bf16.xpose.msra.mxu0 0
        %1320 = vmatprep.subr.bf16.mxu0 0
        %1321 = vmatpush1.bf16.xpose.msra.mxu0 0
        %1322 = vmatprep.subr.bf16.mxu0 0
        %1323 = vmatpush1.bf16.xpose.msra.mxu0 0
        %1324 = vmatprep.mubr.bf16.mxu0 0
        %1325 = vmatmul.mubr.bf16.gmra.mrb[0].mxu0 %v1266
        %v1326 = vpop.f32.mrb[0].mxu0
        %v1327 = vadd.f32 %v1264, %v1326
        %v1328 = vpop.f32.mrb[0].mxu0
        %v1329 = vpop.f32.mrb[0].mxu0
        %v1330 = vpop.f32.mrb[0].mxu0
        %1331 = vdwg.mxu0
        %1332 = vst [vmem:[%s381] sm:$0x1] %v1327
        %s1333 = sand.u32 %s271, 1
        %s1334 = scalar_lea.sflag [#allocation4], %s1333
        %s1335 = sand.u32 %s271, 1
        %s1336 = scalar_lea.vmem [#allocation3], %s1335
        // Predicated region
        $region65: #{tpu_custom_call.1} parent=63 // pred_check
          %p1337 = pneg %p281
        $region66: #{tpu_custom_call.1} parent=63 // pred_check_branch
          %1339 = sbr.rel (%p1337) target = $region68
        $region67: #{tpu_custom_call.1} parent=63 // pred_region
          %s1341 = ssub.s32 16, 16
          %1342 = vsyncadd %s1334, %s1341
          %s1343 = smul.addr %s27, 16
          %s1344 = scalar_lea.hbm %s11, %s1343
          %s1346 = sshll.u32 %s1336, 4
          %s1347 = int_to_ptr.vmem [resolvable:$true] %s1346
          %1349 = dma.vmem_to_hbm [thread:$0]  %s1347, 16, %s1344, %s1334
        $region68: #{tpu_custom_call.1} parent=63 // pred_fallthru
          _
      $region64: #{tpu_custom_call.1} parent=5 // pred_fallthru
        _
      %p1350 = scmp.le.s32.totalorder 2, %s22
      // Predicated region
      $region69: #{tpu_custom_call.1} parent=5 // pred_check
        %p1351 = pneg %p1350
      $region70: #{tpu_custom_call.1} parent=5 // pred_check_branch
        %1353 = sbr.rel (%p1351) target = $region72
      $region71: #{tpu_custom_call.1} parent=5 // pred_region
        %s1354 = ssub.s32 %s22, 2
        // Predicated region
        $region73: #{tpu_custom_call.1} parent=71 // pred_check
          %p1355 = pneg %p287
        $region74: #{tpu_custom_call.1} parent=71 // pred_check_branch
          %1357 = sbr.rel (%p1355) target = $region76
        $region75: #{tpu_custom_call.1} parent=71 // pred_region
          %s1358 = sand.u32 %s272, 1
          %s1359 = scalar_lea.sflag [#allocation4], %s1358
          %s1360 = sand.u32 %s272, 1
          %s1361 = scalar_lea.vmem [#allocation3], %s1360
          %1362 = dma.done %s1359, 16
        $region76: #{tpu_custom_call.1} parent=71 // pred_fallthru
          _
      $region72: #{tpu_custom_call.1} parent=5 // pred_fallthru
        _
    $region6: #{tpu_custom_call.1} parent=1 // loop_footer
      %s26 = sadd.s32 1, %s22
    $region7: #{tpu_custom_call.1} parent=1 // loop_footer_branch
      %21 = sbr.rel target = $region3
    $region8: #{tpu_custom_call.1} parent=1 // loop_exit
      _
    %1363 = vsyncpa [#allocation4], 1
    %s1364 = scalar_lea.sflag [#allocation4], 1
    %1365 = vsyncpa %s1364, 1

</llo_original>
